<compile_context>
chip_gen: v7x
topology: tpu7x:2x2x1
jax: 0.10.0
libtpu: 0.0.40
codegen_flags: <defaults>
</compile_context>

<pallas_src>
import functools

import jax
import jax.numpy as jnp
from jax.experimental import pallas as pl
from jax.experimental.pallas import tpu as pltpu


_LANES = 128
_SUBLANES = 8
# 4096 rows * 128 lanes * 4 B = 2 MiB per f32 block; double-buffered = 4 MiB.
_MAX_ROW_TILE = 4096
# Sublane multiple legal for every dtype (f32:8, bf16:16, int8:32).
_ROW_ALIGN = 32


def _round_up(x: int, m: int) -> int:
    return ((x + m - 1) // m) * m


def _pow_sum_kernel(x_ref, acc_ref, *, p):
    """Accumulate per-lane partial sums of |x|^p into an (8,128) vreg block."""
    @pl.when(pl.program_id(1) == 0)
    def _():
        acc_ref[...] = jnp.zeros_like(acc_ref)

    x = x_ref[...].astype(jnp.float32)
    if p == 2:
        v = x * x
    elif p == 1:
        v = jnp.abs(x)
    else:
        v = jnp.abs(x) ** p
    # (row_tile, 128) -> (row_tile//8, 8, 128); reducing the leading axis is a
    # plain sequence of full-vreg VPU adds (no per-step XLU / scalar store).
    acc_ref[...] += jnp.sum(v.reshape(-1, _SUBLANES, _LANES), axis=0)


def _pow_norm_sum(x: jax.Array, p, *, max_row_tile: int = _MAX_ROW_TILE) -> jax.Array:
    """sum(|x|^p) over all elements of `x`, returned as an f32 scalar."""
    flat = x.reshape(-1)
    size = flat.shape[0]

    # Lane-dense view: (rows, 128).
    rows = pl.cdiv(size, _LANES)
    row_tile = min(max_row_tile, _round_up(rows, _ROW_ALIGN))
    row_tile = _round_up(row_tile, _ROW_ALIGN)
    n_blocks = pl.cdiv(rows, row_tile)

    # Outer "parallel" axis: lets v7x's 2 TensorCores each take half the
    # stream; only split when there is enough work for both halves.
    n_outer = 2 if n_blocks >= 4 else 1
    n_inner = pl.cdiv(n_blocks, n_outer)

    padded_rows = n_outer * n_inner * row_tile
    pad = padded_rows * _LANES - size
    if pad:
        # Zero padding contributes nothing to sum(|x|^p) for p >= 1.
        flat = jnp.concatenate([flat, jnp.zeros((pad,), dtype=flat.dtype)])
    x2 = flat.reshape(padded_rows, _LANES)

    partials = pl.pallas_call(
        functools.partial(_pow_sum_kernel, p=p),
        out_shape=jax.ShapeDtypeStruct((n_outer, _SUBLANES, _LANES), jnp.float32),
        grid_spec=pl.GridSpec(
            grid=(n_outer, n_inner),
            in_specs=[
                pl.BlockSpec(
                    (row_tile, _LANES),
                    lambda o, i, n_inner=n_inner: (o * n_inner + i, 0),
                )
            ],
            # One (8,128) accumulator block per outer index, resident across
            # the inner (reduction) axis.
            out_specs=pl.BlockSpec(
                (None, _SUBLANES, _LANES), lambda o, i: (o, 0, 0)
            ),
        ),
        compiler_params=pltpu.CompilerParams(
            dimension_semantics=("parallel", "arbitrary"),
        ),
    )(x2)

    # Tiny epilogue reduce (n_outer * 8 * 128 values) in JAX.
    return jnp.sum(partials)


class EmbLoss:
    """JAX/Pallas port of torchfm.model.cmf.EmbLoss."""

    def __init__(self, norm: int = 2):
        self.norm = norm

    def __call__(self, *embeddings, require_pow: bool = False) -> jax.Array:
        p = self.norm
        batch = embeddings[-1].shape[0]

        # TODO(synk): fuse all embeddings into a single segmented pallas_call
        # (per-embedding partial outputs) to amortize launch overhead when many
        # small tables are passed.
        emb_loss = jnp.zeros((1,), dtype=jnp.float32)
        for emb in embeddings:
            pow_sum = _pow_norm_sum(emb, p)          # sum |x|^p  ==  ||x||_p^p
            if require_pow:
                emb_loss = emb_loss + pow_sum
            else:
                emb_loss = emb_loss + pow_sum ** (1.0 / p)   # ||x||_p
        emb_loss = emb_loss / batch
        if require_pow:
            emb_loss = emb_loss / p
        return emb_loss


if __name__ == "__main__":
    key = jax.random.PRNGKey(0)
    k_user, k_item, k_rag, k_grid = jax.random.split(key, 4)

    # Two embedding tables, as the CMF model would pass (user emb, item emb).
    emb_user = jax.random.normal(k_user, (16, 32), dtype=jnp.float32)
    emb_item = jax.random.normal(k_item, (16, 32), dtype=jnp.float32)

    loss_fn = EmbLoss(norm=2)
    out = loss_fn(emb_user, emb_item, require_pow=False)
    out_pow = loss_fn(emb_user, emb_item, require_pow=True)
    jax.block_until_ready(out)
    jax.block_until_ready(out_pow)

    # Pure-JAX reference checks.
    ref = (jnp.linalg.norm(emb_user) + jnp.linalg.norm(emb_item)) / emb_item.shape[0]
    ref_pow = (jnp.sum(emb_user ** 2) + jnp.sum(emb_item ** 2)) / emb_item.shape[0] / 2.0
    assert out.shape == (1,) and out_pow.shape == (1,)
    assert jnp.allclose(out[0], ref, rtol=1e-5, atol=1e-5)
    assert jnp.allclose(out_pow[0], ref_pow, rtol=1e-5, atol=1e-5)

    # Ragged size: exercises the lane-dense reshape + zero-pad path.
    emb_rag = jax.random.normal(k_rag, (10, 48), dtype=jnp.float32)
    got_rag = _pow_norm_sum(emb_rag, 2)
    jax.block_until_ready(got_rag)
    assert jnp.allclose(got_rag, jnp.sum(emb_rag ** 2), rtol=1e-5, atol=1e-5)

    # Multi-block 2-D grid path (parallel outer axis + inner reduction axis),
    # exercised at small size by shrinking the row tile.
    emb_grid = jax.random.normal(k_grid, (200, 128), dtype=jnp.float32)
    got_grid = _pow_norm_sum(emb_grid, 2, max_row_tile=32)
    jax.block_until_ready(got_grid)
    assert jnp.allclose(got_grid, jnp.sum(emb_grid ** 2), rtol=1e-4, atol=1e-4)

    print("KERNEL_OK")
</pallas_src>

<mosaic_0001>
module attributes {stable_mosaic.version = 11 : i64} {
  func.func @_pow_sum_kernel(%arg0: i32, %arg1: i32, %arg2: memref<32x128xf32, #tpu.memory_space<vmem>>, %arg3: memref<1x8x128xf32, #tpu.memory_space<vmem>>) attributes {dimension_semantics = [#tpu.dimension_semantics<parallel>, #tpu.dimension_semantics<arbitrary>], iteration_bounds = array<i64: 1, 1>, scalar_prefetch = 0 : i64, scratch_operands = 0 : i64, tpu.core_type = #tpu.core_type<tc>, window_params = [{transform_indices = @transform_0, window_bounds = array<i64: 32, 128>}, {transform_indices = @transform_1, window_bounds = array<i64: 1, 8, 128>}]} {
    %c0_i32 = arith.constant 0 : i32
    %0 = arith.cmpi eq, %arg1, %c0_i32 : i32
    %1 = arith.extui %0 : i1 to i32
    %c0_i32_0 = arith.constant 0 : i32
    %2 = arith.cmpi ne, %1, %c0_i32_0 : i32
    scf.if %2 {
      %cst_8 = arith.constant 0.000000e+00 : f32
      %13 = vector.broadcast %cst_8 : f32 to vector<8x128xf32>
      %c0_9 = arith.constant 0 : index
      %c0_10 = arith.constant 0 : index
      %c0_11 = arith.constant 0 : index
      %14 = vector.load %arg3[%c0_9, %c0_10, %c0_11] : memref<1x8x128xf32, #tpu.memory_space<vmem>>, vector<1x8x128xf32>
      %15 = vector.shape_cast %14 : vector<1x8x128xf32> to vector<8x128xf32>
      %16 = vector.shape_cast %13 : vector<8x128xf32> to vector<1x8x128xf32>
      tpu.vector_store %arg3[%c0_9, %c0_10, %c0_11], %16 {strides = array<i32>} : memref<1x8x128xf32, #tpu.memory_space<vmem>>, vector<1x8x128xf32>,
    } else {
    }
    %c0 = arith.constant 0 : index
    %c0_1 = arith.constant 0 : index
    %3 = vector.load %arg2[%c0, %c0_1] : memref<32x128xf32, #tpu.memory_space<vmem>>, vector<32x128xf32>
    %4 = arith.mulf %3, %3 : vector<32x128xf32>
    %c0_2 = arith.constant 0 : index
    %c0_3 = arith.constant 0 : index
    %c0_4 = arith.constant 0 : index
    %5 = vector.load %arg3[%c0_2, %c0_3, %c0_4] : memref<1x8x128xf32, #tpu.memory_space<vmem>>, vector<1x8x128xf32>
    %6 = vector.shape_cast %5 : vector<1x8x128xf32> to vector<8x128xf32>
    %7 = vector.shape_cast %4 : vector<32x128xf32> to vector<4x8x128xf32>
    %cst = arith.constant dense<0.000000e+00> : vector<8x128xf32>
    %8 = vector.multi_reduction <add>, %7, %cst [0] : vector<4x8x128xf32> to vector<8x128xf32>
    %9 = arith.addf %6, %8 : vector<8x128xf32>
    %c0_5 = arith.constant 0 : index
    %c0_6 = arith.constant 0 : index
    %c0_7 = arith.constant 0 : index
    %10 = vector.load %arg3[%c0_5, %c0_6, %c0_7] : memref<1x8x128xf32, #tpu.memory_space<vmem>>, vector<1x8x128xf32>
    %11 = vector.shape_cast %10 : vector<1x8x128xf32> to vector<8x128xf32>
    %12 = vector.shape_cast %9 : vector<8x128xf32> to vector<1x8x128xf32>
    tpu.vector_store %arg3[%c0_5, %c0_6, %c0_7], %12 {strides = array<i32>} : memref<1x8x128xf32, #tpu.memory_space<vmem>>, vector<1x8x128xf32>,
    return
  }
  func.func @transform_0(%arg0: i32, %arg1: i32) -> (i32, i32) {
    %c1_i32 = arith.constant 1 : i32
    %0 = arith.muli %arg0, %c1_i32 : i32
    %1 = arith.addi %0, %arg1 : i32
    %c0_i32 = arith.constant 0 : i32
    %c0_i32_0 = arith.constant 0 : i32
    return %1, %c0_i32 : i32, i32
  }
  func.func @transform_1(%arg0: i32, %arg1: i32) -> (i32, i32, i32) {
    %c0_i32 = arith.constant 0 : i32
    %c0_i32_0 = arith.constant 0 : i32
    %c0_i32_1 = arith.constant 0 : i32
    return %arg0, %c0_i32, %c0_i32_0 : i32, i32, i32
  }
}

</mosaic_0001>

<llo_original>
// kernel: tpu_custom_call.1
$region0: #{tpu_custom_call.1}
  #allocation0 [shape = 'u32[]', space=smem, size = 0x4, offset = 0x4, fixed_abs, tag = 'smem constant byte address 0x4 - core index']
  #allocation1 [shape = 'u32[144,128]{1,0:T(1,128)}', space=vmem, size = 0x12000, scoped, tag = 'internal scratch']
  %s0 = inlined_call_operand.hbm [shape: f32[32,128], index: 0, kind: input, shape index: {}]
  %s1 = inlined_call_operand.hbm [shape: f32[1,8,128], index: 1, kind: output, shape index: {}]
  %s2 = sld [smem:[#allocation0]]
  $region22: #{tpu_custom_call.1} parent=0
    _
  %s4 = ssub.s32 1, %s2
  %s5 = scalar_select 0, %s4, %s2
  $region1: #{tpu_custom_call.1} parent=0
    #allocation2 [shape = 'u8[16384]{0}', space=vmem, size = 0x4000, scoped, tag = 'input window, operand 0, single buffered']
    #allocation3 [shape = 's32[1]{0}', space=sflag, size = 0x4, scoped, tag = 'scoped memory for tpu_custom_call.1']
    #allocation4 [shape = 's32[1]{0}', space=sflag, size = 0x4, scoped, tag = 'scoped memory for tpu_custom_call.1']
    #allocation5 [shape = 'u8[4096]{0}', space=vmem, size = 0x1000, scoped, tag = 'output window, operand 0, single buffered']
    %6 = vsyncpa [#allocation3], 0
    %7 = vsyncpa [#allocation4], 0
    // Predicated region
    $region2: #{tpu_custom_call.1} parent=1 // pred_check
      _
    $region3: #{tpu_custom_call.1} parent=1 // pred_check_branch
      %9 = sbr.rel (0) target = $region5
    $region4: #{tpu_custom_call.1} parent=1 // pred_region
      %s10 = sadd.s32 0, 0
      %s11 = smul.u32 4, %s10
      %s13 = ssub.s32 512, 512
      %14 = vsyncadd [#allocation3], %s13
      %s15 = smul.addr %s11, 128
      %s16 = scalar_lea.hbm %s0, %s15
      %s17 = sshll.u32 [#allocation2], 4
      %s18 = int_to_ptr.vmem [resolvable:$true] %s17
      %23 = dma.hbm_to_vmem [thread:$0]  %s16, 512, %s18, [#allocation3], 128, 128, 8
    $region5: #{tpu_custom_call.1} parent=1 // pred_fallthru
      _
    // Predicated region
    $region6: #{tpu_custom_call.1} parent=1 // pred_check
      _
    $region7: #{tpu_custom_call.1} parent=1 // pred_check_branch
      %25 = sbr.rel (0) target = $region9
    $region8: #{tpu_custom_call.1} parent=1 // pred_region
      %26 = dma.done [#allocation3], 512
    $region9: #{tpu_custom_call.1} parent=1 // pred_fallthru
      _
    %s27 = sadd.s32 0, 0
    %s28 = smul.u32 4, %s27
    %p29 = scmp.eq.s32.totalorder 0, 0
    // Predicated region
    $region10: #{tpu_custom_call.1} parent=1 // pred_check
      %p30 = pneg %p29
    $region11: #{tpu_custom_call.1} parent=1 // pred_check_branch
      %32 = sbr.rel (%p30) target = $region13
    $region12: #{tpu_custom_call.1} parent=1 // pred_region
      %33 = vst [vmem:[#allocation5] sm:$0xff] 0.0
    $region13: #{tpu_custom_call.1} parent=1 // pred_fallthru
      _
    %v34 = vld [vmem:[#allocation2] sm:$0xff]
    %v35 = vld [vmem:[#allocation2 + $0x8] sm:$0xff]
    %v36 = vld [vmem:[#allocation2 + $0x10] sm:$0xff]
    %v37 = vld [vmem:[#allocation2 + $0x18] sm:$0xff]
    %v38 = vmul.f32 %v34, %v34
    %v39 = vmul.f32 %v35, %v35
    %v40 = vmul.f32 %v36, %v36
    %v41 = vmul.f32 %v37, %v37
    %v42 = vld [vmem:[#allocation5] sm:$0xff]
    %v43 = vadd.f32 %v38, %v39
    %v44 = vadd.f32 %v43, %v40
    %v45 = vadd.f32 %v44, %v41
    %v46 = vadd.f32 %v42, %v45
    %47 = vst [vmem:[#allocation5] sm:$0xff] %v46
    // Predicated region
    $region14: #{tpu_custom_call.1} parent=1 // pred_check
      _
    $region15: #{tpu_custom_call.1} parent=1 // pred_check_branch
      %49 = sbr.rel (0) target = $region17
    $region16: #{tpu_custom_call.1} parent=1 // pred_region
      %s51 = ssub.s32 128, 128
      %52 = vsyncadd [#allocation4], %s51
      %s54 = sshll.u32 [#allocation5], 4
      %s55 = int_to_ptr.vmem [resolvable:$true] %s54
      %57 = dma.vmem_to_hbm [thread:$0]  %s55, 128, %s1, [#allocation4]
    $region17: #{tpu_custom_call.1} parent=1 // pred_fallthru
      _
    // Predicated region
    $region18: #{tpu_custom_call.1} parent=1 // pred_check
      _
    $region19: #{tpu_custom_call.1} parent=1 // pred_check_branch
      %59 = sbr.rel (0) target = $region21
    $region20: #{tpu_custom_call.1} parent=1 // pred_region
      %60 = dma.done [#allocation4], 128
    $region21: #{tpu_custom_call.1} parent=1 // pred_fallthru
      _
    %61 = vsyncpa [#allocation3], 1
    %62 = vsyncpa [#allocation4], 1

</llo_original>
